<compile_context>
chip_gen: v7x
topology: tpu7x:2x2x1
jax: 0.10.0
libtpu: 0.0.40
codegen_flags: <defaults>
</compile_context>

<pallas_src>
import functools

import jax
import jax.numpy as jnp
from jax.experimental import pallas as pl
from jax.experimental.pallas import tpu as pltpu


# ----------------------------------------------------------------------------
# Fused ADAIN kernel: per (batch-tile, channel-tile) block.
# ----------------------------------------------------------------------------
def _adain_fused_kernel(f_ref, wsh_ref, bsh_ref, wg_ref, bg_ref, wb_ref, bb_ref,
                        x_ref, o_ref, *, bt, eps, inv_hw):
    # f_ref  : (B, F)      whole style-feature matrix, VMEM-resident
    # wsh_ref: (F, NH)     shared MLP weight, (in, out) layout
    # bsh_ref: (1, NH)
    # wg_ref : (Ct, NH)    gamma head rows for this channel tile, (out, in)
    # bg_ref : (Ct, 1)
    # wb_ref : (Ct, NH)    beta head rows for this channel tile
    # bb_ref : (Ct, 1)
    # x_ref  : (Bt, Ct, HW)
    # o_ref  : (Bt, Ct, HW)
    bi = pl.program_id(0)

    # ---- MLP head (tiny -> VPU broadcast + XLU lane-reduce, no MXU) --------
    f = f_ref[pl.ds(bi * bt, bt), :].astype(jnp.float32)            # (Bt, F)
    actv = jnp.sum(f[:, :, None] * wsh_ref[...][None, :, :], axis=1) \
        + bsh_ref[...]                                              # (Bt, NH)
    actv = jnp.maximum(actv, 0.0)
    gamma = jnp.sum(actv[:, None, :] * wg_ref[...][None, :, :],
                    axis=-1)[:, :, None] + bg_ref[...][None, :, :]  # (Bt, Ct, 1)
    beta = jnp.sum(actv[:, None, :] * wb_ref[...][None, :, :],
                   axis=-1)[:, :, None] + bb_ref[...][None, :, :]   # (Bt, Ct, 1)

    # ---- InstanceNorm stats: single pass over x (lane reductions, f32) -----
    x = x_ref[...].astype(jnp.float32)                              # (Bt, Ct, HW)
    s1 = jnp.sum(x, axis=-1, keepdims=True)
    s2 = jnp.sum(x * x, axis=-1, keepdims=True)
    mean = s1 * inv_hw
    var = jnp.maximum(s2 * inv_hw - mean * mean, 0.0)               # clamp >= 0

    # ---- fused per-channel scale/shift: out = x * scale + shift ------------
    scale = jax.lax.rsqrt(var + eps) * (1.0 + gamma)                # (Bt, Ct, 1)
    shift = beta - mean * scale
    o_ref[...] = (x * scale + shift).astype(o_ref.dtype)


# ----------------------------------------------------------------------------
# Tile chooser: fit per-buffer blocks in a conservative VMEM budget, keep the
# reductions per-channel local, and leave >= 2 grid steps for v7x's two TCs.
# ----------------------------------------------------------------------------
def _choose_tiles(B, C, HW, itemsize, budget_bytes=2 * 1024 * 1024):
    per_ch = HW * itemsize
    # Channel tile: largest multiple-of-8 divisor of C (or C itself) whose
    # single-sample block fits the per-buffer budget.
    ct = C
    if C * per_ch > budget_bytes:
        best = None
        for cand in range(8, C, 8):
            if C % cand == 0 and cand * per_ch <= budget_bytes:
                best = cand
        if best is not None:
            ct = best
    # Batch tile: fold samples per step while under budget and while keeping
    # at least 2 grid steps total.
    bt = 1
    if ct == C:
        for cand in range(1, B + 1):
            if B % cand != 0 or cand * C * per_ch > budget_bytes:
                continue
            if (B // cand) * (C // ct) >= 2 or B == 1:
                bt = cand
    # If only a single grid step remains (e.g. B == 1), split C once so the
    # second TensorCore on v7x has work.
    if (B // bt) * (C // ct) < 2 and ct == C and C % 16 == 0:
        ct = C // 2
        bt = 1
    return bt, ct


def adain_forward(x, feature, params, *, eps=1e-5):
    """ADAIN forward.  x: (B, C, H, W) NCHW, feature: (B, feature_nc)."""
    B, C, H, W = x.shape
    HW = H * W
    xr = x.reshape(B, C, HW)                       # spatial axis -> lanes
    io_dtype = xr.dtype                            # bf16 in -> bf16 I/O, f32 math

    f = feature.reshape(B, -1)                     # feature.view(B, -1)
    Fdim = f.shape[1]

    # One-time weight repack (outside the kernel): shared head as (in, out);
    # gamma/beta heads kept in PyTorch (out, in) layout so they slice along C.
    wsh = params["w_shared"].T.astype(jnp.float32)                 # (F, NH)
    NH = wsh.shape[1]
    bsh = params["b_shared"].reshape(1, NH).astype(jnp.float32)
    wg = params["w_gamma"].astype(jnp.float32)                     # (C, NH)
    bg = params["b_gamma"].reshape(C, 1).astype(jnp.float32)
    wb = params["w_beta"].astype(jnp.float32)                      # (C, NH)
    bb = params["b_beta"].reshape(C, 1).astype(jnp.float32)

    bt, ct = _choose_tiles(B, C, HW, jnp.dtype(io_dtype).itemsize)

    kernel = functools.partial(_adain_fused_kernel, bt=bt, eps=eps,
                               inv_hw=1.0 / HW)
    out = pl.pallas_call(
        kernel,
        out_shape=jax.ShapeDtypeStruct((B, C, HW), io_dtype),
        grid=(B // bt, C // ct),
        in_specs=[
            pl.BlockSpec((B, Fdim), lambda bi, ci: (0, 0)),        # feature, resident
            pl.BlockSpec((Fdim, NH), lambda bi, ci: (0, 0)),       # shared weight
            pl.BlockSpec((1, NH), lambda bi, ci: (0, 0)),          # shared bias
            pl.BlockSpec((ct, NH), lambda bi, ci: (ci, 0)),        # gamma weight tile
            pl.BlockSpec((ct, 1), lambda bi, ci: (ci, 0)),         # gamma bias tile
            pl.BlockSpec((ct, NH), lambda bi, ci: (ci, 0)),        # beta weight tile
            pl.BlockSpec((ct, 1), lambda bi, ci: (ci, 0)),         # beta bias tile
            pl.BlockSpec((bt, ct, HW), lambda bi, ci: (bi, ci, 0)),  # x tile
        ],
        out_specs=pl.BlockSpec((bt, ct, HW), lambda bi, ci: (bi, ci, 0)),
        compiler_params=pltpu.CompilerParams(
            dimension_semantics=("parallel", "parallel")),
    )(f, wsh, bsh, wg, bg, wb, bb, xr)
    return out.reshape(B, C, H, W)


# ----------------------------------------------------------------------------
# Parameters (PyTorch nn.Linear layout: weight (out, in), default uniform init)
# ----------------------------------------------------------------------------
def make_params(key, norm_nc, feature_nc, nhidden=128):
    ks = jax.random.split(key, 6)

    def lin_w(k, fout, fin):
        bound = 1.0 / (fin ** 0.5)
        return jax.random.uniform(k, (fout, fin), jnp.float32, -bound, bound)

    def lin_b(k, fout, fin):
        bound = 1.0 / (fin ** 0.5)
        return jax.random.uniform(k, (fout,), jnp.float32, -bound, bound)

    return {
        "w_shared": lin_w(ks[0], nhidden, feature_nc),
        "b_shared": lin_b(ks[1], nhidden, feature_nc),
        "w_gamma": lin_w(ks[2], norm_nc, nhidden),
        "b_gamma": lin_b(ks[3], norm_nc, nhidden),
        "w_beta": lin_w(ks[4], norm_nc, nhidden),
        "b_beta": lin_b(ks[5], norm_nc, nhidden),
    }


# ----------------------------------------------------------------------------
# Pure-JAX reference (mirrors the PyTorch module exactly)
# ----------------------------------------------------------------------------
def adain_reference(x, feature, p, eps=1e-5):
    B = x.shape[0]
    mean = jnp.mean(x, axis=(2, 3), keepdims=True)
    var = jnp.mean(jnp.square(x - mean), axis=(2, 3), keepdims=True)
    normalized = (x - mean) / jnp.sqrt(var + eps)
    f = feature.reshape(B, -1)
    hp = jax.lax.Precision.HIGHEST
    actv = jax.nn.relu(jnp.dot(f, p["w_shared"].T, precision=hp) + p["b_shared"])
    gamma = jnp.dot(actv, p["w_gamma"].T, precision=hp) + p["b_gamma"]
    beta = jnp.dot(actv, p["w_beta"].T, precision=hp) + p["b_beta"]
    return normalized * (1.0 + gamma[:, :, None, None]) + beta[:, :, None, None]


# ----------------------------------------------------------------------------
if __name__ == "__main__":
    # ADAIN(norm_nc=32, feature_nc=8); x (B, C, H, W) NCHW like PyTorch.
    B, C, Fdim, H, W = 2, 32, 8, 16, 16

    key = jax.random.PRNGKey(0)
    kx, kf, kp = jax.random.split(key, 3)
    x = jax.random.normal(kx, (B, C, H, W), jnp.float32)
    feature = jax.random.normal(kf, (B, Fdim), jnp.float32)
    params = make_params(kp, norm_nc=C, feature_nc=Fdim)

    out = jax.block_until_ready(adain_forward(x, feature, params))
    ref = jax.block_until_ready(adain_reference(x, feature, params))

    assert out.shape == (B, C, H, W), out.shape
    assert bool(jnp.all(jnp.isfinite(out)))
    max_err = float(jnp.max(jnp.abs(out - ref)))
    assert max_err < 1e-3, max_err
    print("KERNEL_OK")
</pallas_src>

<mosaic_0001>
module attributes {stable_mosaic.version = 11 : i64} {
  func.func @_adain_fused_kernel(%arg0: i32, %arg1: i32, %arg2: memref<2x8xf32, #tpu.memory_space<vmem>>, %arg3: memref<8x128xf32, #tpu.memory_space<vmem>>, %arg4: memref<1x128xf32, #tpu.memory_space<vmem>>, %arg5: memref<32x128xf32, #tpu.memory_space<vmem>>, %arg6: memref<32x1xf32, #tpu.memory_space<vmem>>, %arg7: memref<32x128xf32, #tpu.memory_space<vmem>>, %arg8: memref<32x1xf32, #tpu.memory_space<vmem>>, %arg9: memref<1x32x256xf32, #tpu.memory_space<vmem>>, %arg10: memref<1x32x256xf32, #tpu.memory_space<vmem>>) attributes {dimension_semantics = [#tpu.dimension_semantics<parallel>, #tpu.dimension_semantics<parallel>], iteration_bounds = array<i64: 2, 1>, scalar_prefetch = 0 : i64, scratch_operands = 0 : i64, tpu.core_type = #tpu.core_type<tc>, window_params = [{pipeline_mode = #tpu.pipeline_mode<synchronous>, transform_indices = @transform_0, window_bounds = array<i64: 2, 8>}, {pipeline_mode = #tpu.pipeline_mode<synchronous>, transform_indices = @transform_1, window_bounds = array<i64: 8, 128>}, {pipeline_mode = #tpu.pipeline_mode<synchronous>, transform_indices = @transform_2, window_bounds = array<i64: 1, 128>}, {transform_indices = @transform_3, window_bounds = array<i64: 32, 128>}, {transform_indices = @transform_4, window_bounds = array<i64: 32, 1>}, {transform_indices = @transform_5, window_bounds = array<i64: 32, 128>}, {transform_indices = @transform_6, window_bounds = array<i64: 32, 1>}, {transform_indices = @transform_7, window_bounds = array<i64: 1, 32, 256>}, {transform_indices = @transform_8, window_bounds = array<i64: 1, 32, 256>}]} {
    %c1_i32 = arith.constant 1 : i32
    %0 = arith.muli %arg0, %c1_i32 : i32
    %1 = arith.index_cast %0 : i32 to index
    %c0 = arith.constant 0 : index
    %2 = vector.load %arg2[%1, %c0] : memref<2x8xf32, #tpu.memory_space<vmem>>, vector<1x8xf32>
    %3 = vector.shape_cast %2 : vector<1x8xf32> to vector<1x8x1xf32>
    %c0_0 = arith.constant 0 : index
    %c0_1 = arith.constant 0 : index
    %4 = vector.load %arg3[%c0_0, %c0_1] : memref<8x128xf32, #tpu.memory_space<vmem>>, vector<8x128xf32>
    %5 = vector.shape_cast %4 : vector<8x128xf32> to vector<1x8x128xf32>
    %6 = vector.broadcast %3 : vector<1x8x1xf32> to vector<1x8x128xf32>
    %7 = arith.mulf %6, %5 : vector<1x8x128xf32>
    %cst = arith.constant dense<0.000000e+00> : vector<1x128xf32>
    %8 = vector.multi_reduction <add>, %7, %cst [1] : vector<1x8x128xf32> to vector<1x128xf32>
    %c0_2 = arith.constant 0 : index
    %c0_3 = arith.constant 0 : index
    %9 = vector.load %arg4[%c0_2, %c0_3] : memref<1x128xf32, #tpu.memory_space<vmem>>, vector<1x128xf32>
    %10 = arith.addf %8, %9 : vector<1x128xf32>
    %cst_4 = arith.constant 0.000000e+00 : f32
    %11 = vector.broadcast %cst_4 : f32 to vector<1x128xf32>
    %12 = arith.maximumf %10, %11 : vector<1x128xf32>
    %13 = vector.shape_cast %12 : vector<1x128xf32> to vector<1x1x128xf32>
    %c0_5 = arith.constant 0 : index
    %c0_6 = arith.constant 0 : index
    %14 = vector.load %arg5[%c0_5, %c0_6] : memref<32x128xf32, #tpu.memory_space<vmem>>, vector<32x128xf32>
    %15 = vector.shape_cast %14 : vector<32x128xf32> to vector<1x32x128xf32>
    %16 = vector.broadcast %13 : vector<1x1x128xf32> to vector<1x32x128xf32>
    %17 = arith.mulf %16, %15 : vector<1x32x128xf32>
    %cst_7 = arith.constant dense<0.000000e+00> : vector<1x32xf32>
    %18 = vector.multi_reduction <add>, %17, %cst_7 [2] : vector<1x32x128xf32> to vector<1x32xf32>
    %19 = vector.shape_cast %18 : vector<1x32xf32> to vector<1x32x1xf32>
    %c0_8 = arith.constant 0 : index
    %c0_9 = arith.constant 0 : index
    %20 = vector.load %arg6[%c0_8, %c0_9] : memref<32x1xf32, #tpu.memory_space<vmem>>, vector<32x1xf32>
    %21 = vector.shape_cast %20 : vector<32x1xf32> to vector<1x32x1xf32>
    %22 = arith.addf %19, %21 : vector<1x32x1xf32>
    %23 = vector.shape_cast %12 : vector<1x128xf32> to vector<1x1x128xf32>
    %c0_10 = arith.constant 0 : index
    %c0_11 = arith.constant 0 : index
    %24 = vector.load %arg7[%c0_10, %c0_11] : memref<32x128xf32, #tpu.memory_space<vmem>>, vector<32x128xf32>
    %25 = vector.shape_cast %24 : vector<32x128xf32> to vector<1x32x128xf32>
    %26 = vector.broadcast %23 : vector<1x1x128xf32> to vector<1x32x128xf32>
    %27 = arith.mulf %26, %25 : vector<1x32x128xf32>
    %cst_12 = arith.constant dense<0.000000e+00> : vector<1x32xf32>
    %28 = vector.multi_reduction <add>, %27, %cst_12 [2] : vector<1x32x128xf32> to vector<1x32xf32>
    %29 = vector.shape_cast %28 : vector<1x32xf32> to vector<1x32x1xf32>
    %c0_13 = arith.constant 0 : index
    %c0_14 = arith.constant 0 : index
    %30 = vector.load %arg8[%c0_13, %c0_14] : memref<32x1xf32, #tpu.memory_space<vmem>>, vector<32x1xf32>
    %31 = vector.shape_cast %30 : vector<32x1xf32> to vector<1x32x1xf32>
    %32 = arith.addf %29, %31 : vector<1x32x1xf32>
    %c0_15 = arith.constant 0 : index
    %c0_16 = arith.constant 0 : index
    %c0_17 = arith.constant 0 : index
    %33 = vector.load %arg9[%c0_15, %c0_16, %c0_17] : memref<1x32x256xf32, #tpu.memory_space<vmem>>, vector<1x32x256xf32>
    %cst_18 = arith.constant dense<0.000000e+00> : vector<1x32xf32>
    %34 = vector.multi_reduction <add>, %33, %cst_18 [2] : vector<1x32x256xf32> to vector<1x32xf32>
    %35 = vector.shape_cast %34 : vector<1x32xf32> to vector<1x32x1xf32>
    %36 = arith.mulf %33, %33 : vector<1x32x256xf32>
    %cst_19 = arith.constant dense<0.000000e+00> : vector<1x32xf32>
    %37 = vector.multi_reduction <add>, %36, %cst_19 [2] : vector<1x32x256xf32> to vector<1x32xf32>
    %38 = vector.shape_cast %37 : vector<1x32xf32> to vector<1x32x1xf32>
    %cst_20 = arith.constant 3.906250e-03 : f32
    %39 = vector.broadcast %cst_20 : f32 to vector<1x32x1xf32>
    %40 = arith.mulf %35, %39 : vector<1x32x1xf32>
    %cst_21 = arith.constant 3.906250e-03 : f32
    %41 = vector.broadcast %cst_21 : f32 to vector<1x32x1xf32>
    %42 = arith.mulf %38, %41 : vector<1x32x1xf32>
    %43 = arith.mulf %40, %40 : vector<1x32x1xf32>
    %44 = arith.subf %42, %43 : vector<1x32x1xf32>
    %cst_22 = arith.constant 0.000000e+00 : f32
    %45 = vector.broadcast %cst_22 : f32 to vector<1x32x1xf32>
    %46 = arith.maximumf %44, %45 : vector<1x32x1xf32>
    %cst_23 = arith.constant 9.99999974E-6 : f32
    %47 = vector.broadcast %cst_23 : f32 to vector<1x32x1xf32>
    %48 = arith.addf %46, %47 : vector<1x32x1xf32>
    %49 = math.rsqrt %48 : vector<1x32x1xf32>
    %cst_24 = arith.constant 1.000000e+00 : f32
    %50 = vector.broadcast %cst_24 : f32 to vector<1x32x1xf32>
    %51 = arith.addf %50, %22 : vector<1x32x1xf32>
    %52 = arith.mulf %49, %51 : vector<1x32x1xf32>
    %53 = arith.mulf %40, %52 : vector<1x32x1xf32>
    %54 = arith.subf %32, %53 : vector<1x32x1xf32>
    %55 = vector.broadcast %52 : vector<1x32x1xf32> to vector<1x32x256xf32>
    %56 = arith.mulf %33, %55 : vector<1x32x256xf32>
    %57 = vector.broadcast %54 : vector<1x32x1xf32> to vector<1x32x256xf32>
    %58 = arith.addf %56, %57 : vector<1x32x256xf32>
    %c0_25 = arith.constant 0 : index
    %c0_26 = arith.constant 0 : index
    %c0_27 = arith.constant 0 : index
    %59 = vector.load %arg10[%c0_25, %c0_26, %c0_27] : memref<1x32x256xf32, #tpu.memory_space<vmem>>, vector<1x32x256xf32>
    tpu.vector_store %arg10[%c0_25, %c0_26, %c0_27], %58 {strides = array<i32>} : memref<1x32x256xf32, #tpu.memory_space<vmem>>, vector<1x32x256xf32>,
    return
  }
  func.func @transform_0(%arg0: i32, %arg1: i32) -> (i32, i32) {
    %c0_i32 = arith.constant 0 : i32
    %c0_i32_0 = arith.constant 0 : i32
    %c0_i32_1 = arith.constant 0 : i32
    return %c0_i32, %c0_i32_0 : i32, i32
  }
  func.func @transform_1(%arg0: i32, %arg1: i32) -> (i32, i32) {
    %c0_i32 = arith.constant 0 : i32
    %c0_i32_0 = arith.constant 0 : i32
    %c0_i32_1 = arith.constant 0 : i32
    return %c0_i32, %c0_i32_0 : i32, i32
  }
  func.func @transform_2(%arg0: i32, %arg1: i32) -> (i32, i32) {
    %c0_i32 = arith.constant 0 : i32
    %c0_i32_0 = arith.constant 0 : i32
    %c0_i32_1 = arith.constant 0 : i32
    return %c0_i32, %c0_i32_0 : i32, i32
  }
  func.func @transform_3(%arg0: i32, %arg1: i32) -> (i32, i32) {
    %c0_i32 = arith.constant 0 : i32
    %c0_i32_0 = arith.constant 0 : i32
    return %arg1, %c0_i32 : i32, i32
  }
  func.func @transform_4(%arg0: i32, %arg1: i32) -> (i32, i32) {
    %c0_i32 = arith.constant 0 : i32
    %c0_i32_0 = arith.constant 0 : i32
    return %arg1, %c0_i32 : i32, i32
  }
  func.func @transform_5(%arg0: i32, %arg1: i32) -> (i32, i32) {
    %c0_i32 = arith.constant 0 : i32
    %c0_i32_0 = arith.constant 0 : i32
    return %arg1, %c0_i32 : i32, i32
  }
  func.func @transform_6(%arg0: i32, %arg1: i32) -> (i32, i32) {
    %c0_i32 = arith.constant 0 : i32
    %c0_i32_0 = arith.constant 0 : i32
    return %arg1, %c0_i32 : i32, i32
  }
  func.func @transform_7(%arg0: i32, %arg1: i32) -> (i32, i32, i32) {
    %c0_i32 = arith.constant 0 : i32
    %c0_i32_0 = arith.constant 0 : i32
    return %arg0, %arg1, %c0_i32 : i32, i32, i32
  }
  func.func @transform_8(%arg0: i32, %arg1: i32) -> (i32, i32, i32) {
    %c0_i32 = arith.constant 0 : i32
    %c0_i32_0 = arith.constant 0 : i32
    return %arg0, %arg1, %c0_i32 : i32, i32, i32
  }
}

</mosaic_0001>

<llo_original>
// kernel: tpu_custom_call.1
$region0: #{tpu_custom_call.1}
  #allocation0 [shape = 'u32[]', space=smem, size = 0x4, offset = 0x4, fixed_abs, tag = 'smem constant byte address 0x4 - core index']
  #allocation1 [shape = 'u32[144,128]{1,0:T(1,128)}', space=vmem, size = 0x12000, scoped, tag = 'internal scratch']
  %s0 = inlined_call_operand.hbm [shape: f32[2,8], index: 0, kind: input, shape index: {}]
  %s1 = inlined_call_operand.hbm [shape: f32[8,128], index: 1, kind: input, shape index: {}]
  %s2 = inlined_call_operand.vmem [shape: f32[1,128], index: 2, kind: input, shape index: {}]
  %s3 = inlined_call_operand.vmem [shape: f32[32,128], index: 3, kind: input, shape index: {}]
  %s4 = inlined_call_operand.vmem [shape: f32[32,1], index: 4, kind: input, shape index: {}]
  %s5 = inlined_call_operand.vmem [shape: f32[32,128], index: 5, kind: input, shape index: {}]
  %s6 = inlined_call_operand.vmem [shape: f32[32,1], index: 6, kind: input, shape index: {}]
  %s7 = inlined_call_operand.hbm [shape: f32[2,32,256], index: 7, kind: input, shape index: {}]
  %s8 = inlined_call_operand.hbm [shape: f32[2,32,256], index: 8, kind: output, shape index: {}]
  %s9 = sld [smem:[#allocation0]]
  $region77: #{tpu_custom_call.1} parent=0
    _
  %s11 = ssub.s32 1, %s9
  %s12 = scalar_select 0, %s11, %s9
  $region1: #{tpu_custom_call.1} parent=0
    #allocation2 [shape = 'u8[1024]{0}', space=vmem, size = 0x400, scoped, tag = 'input window, operand 0, single buffered']
    #allocation3 [shape = 's32[2]{0}', space=sflag, size = 0x8, scoped, tag = 'scoped memory for tpu_custom_call.1']
    #allocation4 [shape = 's32[2]{0}', space=sflag, size = 0x8, scoped, tag = 'scoped memory for tpu_custom_call.1']
    #allocation5 [shape = 'u8[4096]{0}', space=vmem, size = 0x1000, scoped, tag = 'input window, operand 1, single buffered']
    #allocation6 [shape = 's32[1]{0}', space=sflag, size = 0x4, scoped, tag = 'scoped memory for tpu_custom_call.1']
    #allocation7 [shape = 'u8[65536]{0}', space=vmem, size = 0x10000, scoped, tag = 'input window, operand 7']
    #allocation8 [shape = 'u8[65536]{0}', space=vmem, size = 0x10000, scoped, tag = 'output window, operand 0']
    %13 = vsyncpa [#allocation3], 0
    %14 = vsyncpa [#allocation6], 0
    %15 = vsyncpa [#allocation4], 0
    %s16 = scalar_lea.sflag [#allocation4], 1
    %17 = vsyncpa %s16, 0
    loop: start=0, step=1, limit=4
    $region2: #{tpu_custom_call.1} parent=1 // loop_pre_header
      _
    $region3: #{tpu_custom_call.1} parent=1 // loop_header
      %s19 = sphi 0, %s23
      %p20 = scmp.ge.s32.totalorder %s19, 4
      %s26 = sphi 0, %s38
      %s27 = sphi 0, %s34
      %s28 = sphi 0, %s26
      %s29 = sphi 0, %s27
      %s30 = sphi 0, %s28
      %s31 = sphi 0, %s29
      %s39 = sphi 0, %s39
      %s41 = sphi 0, %s39
      %s42 = sphi 0, %s41
      %s56 = sphi 0, %s42
      %s60 = sphi 0, %s60
      %s62 = sphi 0, %s60
      %s63 = sphi 0, %s62
      %s77 = sphi 0, %s63
      %s81 = sphi 0, %s81
      %s83 = sphi 0, %s81
      %s84 = sphi 0, %s83
      %s98 = sphi 0, %s84
      %s104 = sphi 0, %s106
      %s107 = sphi 0, %s104
      %s108 = sphi 0, %s107
      %s124 = sphi 0, %s108
      %s130 = sphi 0, %s132
      %s133 = sphi 0, %s130
      %s134 = sphi 0, %s133
      %s150 = sphi 0, %s134
      %s156 = sphi 0, %s158
      %s159 = sphi 0, %s156
      %s160 = sphi 0, %s159
      %s176 = sphi 0, %s160
      %s182 = sphi 0, %s184
      %s185 = sphi 0, %s182
      %s186 = sphi 0, %s185
      %s202 = sphi 0, %s186
      %s210 = sphi 0, %s212
      %s213 = sphi 0, %s210
      %s214 = sphi 0, %s213
      %s230 = sphi 0, %s214
      %s238 = sphi 0, %s240
      %s241 = sphi 0, %s238
      %s242 = sphi 0, %s241
      %s258 = sphi 0, %s242
    $region4: #{tpu_custom_call.1} parent=1 // loop_header_branch
      %22 = sbr.rel (%p20) target = $region8
    $region5: #{tpu_custom_call.1} parent=1 // loop_body
      %s24 = ssub.s32 %s19, 1
      %s25 = ssub.s32 %s19, 2
      %s32 = sadd.s32 1, %s27
      %p33 = scmp.ge.s32.totalorder %s32, 1
      %s34 = scalar_select %p33, 0, %s32
      %s35 = sadd.s32 1, %s26
      %s36 = scalar_select %p33, %s35, %s26
      %p37 = scmp.ge.s32.totalorder %s36, 2
      %s38 = scalar_select %p37, 0, %s36
      %s40 = sadd.s32 %s39, 1
      %p43 = scmp.eq.s32.totalorder %s19, 1
      %p44 = scmp.ne.s32.totalorder %s39, %s41
      %p45 = scmp.eq.s32.totalorder %s19, 0
      %p46 = por %p44, %p45
      %p47 = scmp.ne.s32.totalorder %s39, %s41
      %p48 = scmp.eq.s32.totalorder %s24, 1
      %p49 = por %p47, %p48
      %p50 = scmp.ne.s32.totalorder %s41, %s42
      %p51 = scmp.eq.s32.totalorder %s24, 0
      %p52 = por %p50, %p51
      %p53 = scmp.ne.s32.totalorder %s41, %s42
      %p54 = scmp.eq.s32.totalorder %s25, 1
      %p55 = por %p53, %p54
      %p57 = scmp.ne.s32.totalorder %s42, %s56
      %p58 = scmp.eq.s32.totalorder %s25, 0
      %p59 = por %p57, %p58
      %s61 = sadd.s32 %s60, 1
      %p64 = scmp.eq.s32.totalorder %s19, 1
      %p65 = scmp.ne.s32.totalorder %s60, %s62
      %p66 = scmp.eq.s32.totalorder %s19, 0
      %p67 = por %p65, %p66
      %p68 = scmp.ne.s32.totalorder %s60, %s62
      %p69 = scmp.eq.s32.totalorder %s24, 1
      %p70 = por %p68, %p69
      %p71 = scmp.ne.s32.totalorder %s62, %s63
      %p72 = scmp.eq.s32.totalorder %s24, 0
      %p73 = por %p71, %p72
      %p74 = scmp.ne.s32.totalorder %s62, %s63
      %p75 = scmp.eq.s32.totalorder %s25, 1
      %p76 = por %p74, %p75
      %p78 = scmp.ne.s32.totalorder %s63, %s77
      %p79 = scmp.eq.s32.totalorder %s25, 0
      %p80 = por %p78, %p79
      %s82 = sadd.s32 %s81, 1
      %p85 = scmp.eq.s32.totalorder %s19, 1
      %p86 = scmp.ne.s32.totalorder %s81, %s83
      %p87 = scmp.eq.s32.totalorder %s19, 0
      %p88 = por %p86, %p87
      %p89 = scmp.ne.s32.totalorder %s81, %s83
      %p90 = scmp.eq.s32.totalorder %s24, 1
      %p91 = por %p89, %p90
      %p92 = scmp.ne.s32.totalorder %s83, %s84
      %p93 = scmp.eq.s32.totalorder %s24, 0
      %p94 = por %p92, %p93
      %p95 = scmp.ne.s32.totalorder %s83, %s84
      %p96 = scmp.eq.s32.totalorder %s25, 1
      %p97 = por %p95, %p96
      %p99 = scmp.ne.s32.totalorder %s84, %s98
      %p100 = scmp.eq.s32.totalorder %s25, 0
      %p101 = por %p99, %p100
      %s102 = ssub.s32 %s27, %s34
      %p103 = scmp.eq.s32.totalorder %s102, 0
      %s105 = sadd.s32 %s104, 1
      %s106 = scalar_select %p103, %s104, %s105
      %p109 = pneg %p103
      %p110 = scmp.eq.s32.totalorder %s19, 1
      %p111 = por %p109, %p110
      %p112 = scmp.ne.s32.totalorder %s104, %s107
      %p113 = scmp.eq.s32.totalorder %s19, 0
      %p114 = por %p112, %p113
      %p115 = scmp.ne.s32.totalorder %s104, %s107
      %p116 = scmp.eq.s32.totalorder %s24, 1
      %p117 = por %p115, %p116
      %p118 = scmp.ne.s32.totalorder %s107, %s108
      %p119 = scmp.eq.s32.totalorder %s24, 0
      %p120 = por %p118, %p119
      %p121 = scmp.ne.s32.totalorder %s107, %s108
      %p122 = scmp.eq.s32.totalorder %s25, 1
      %p123 = por %p121, %p122
      %p125 = scmp.ne.s32.totalorder %s108, %s124
      %p126 = scmp.eq.s32.totalorder %s25, 0
      %p127 = por %p125, %p126
      %s128 = ssub.s32 %s27, %s34
      %p129 = scmp.eq.s32.totalorder %s128, 0
      %s131 = sadd.s32 %s130, 1
      %s132 = scalar_select %p129, %s130, %s131
      %p135 = pneg %p129
      %p136 = scmp.eq.s32.totalorder %s19, 1
      %p137 = por %p135, %p136
      %p138 = scmp.ne.s32.totalorder %s130, %s133
      %p139 = scmp.eq.s32.totalorder %s19, 0
      %p140 = por %p138, %p139
      %p141 = scmp.ne.s32.totalorder %s130, %s133
      %p142 = scmp.eq.s32.totalorder %s24, 1
      %p143 = por %p141, %p142
      %p144 = scmp.ne.s32.totalorder %s133, %s134
      %p145 = scmp.eq.s32.totalorder %s24, 0
      %p146 = por %p144, %p145
      %p147 = scmp.ne.s32.totalorder %s133, %s134
      %p148 = scmp.eq.s32.totalorder %s25, 1
      %p149 = por %p147, %p148
      %p151 = scmp.ne.s32.totalorder %s134, %s150
      %p152 = scmp.eq.s32.totalorder %s25, 0
      %p153 = por %p151, %p152
      %s154 = ssub.s32 %s27, %s34
      %p155 = scmp.eq.s32.totalorder %s154, 0
      %s157 = sadd.s32 %s156, 1
      %s158 = scalar_select %p155, %s156, %s157
      %p161 = pneg %p155
      %p162 = scmp.eq.s32.totalorder %s19, 1
      %p163 = por %p161, %p162
      %p164 = scmp.ne.s32.totalorder %s156, %s159
      %p165 = scmp.eq.s32.totalorder %s19, 0
      %p166 = por %p164, %p165
      %p167 = scmp.ne.s32.totalorder %s156, %s159
      %p168 = scmp.eq.s32.totalorder %s24, 1
      %p169 = por %p167, %p168
      %p170 = scmp.ne.s32.totalorder %s159, %s160
      %p171 = scmp.eq.s32.totalorder %s24, 0
      %p172 = por %p170, %p171
      %p173 = scmp.ne.s32.totalorder %s159, %s160
      %p174 = scmp.eq.s32.totalorder %s25, 1
      %p175 = por %p173, %p174
      %p177 = scmp.ne.s32.totalorder %s160, %s176
      %p178 = scmp.eq.s32.totalorder %s25, 0
      %p179 = por %p177, %p178
      %s180 = ssub.s32 %s27, %s34
      %p181 = scmp.eq.s32.totalorder %s180, 0
      %s183 = sadd.s32 %s182, 1
      %s184 = scalar_select %p181, %s182, %s183
      %p187 = pneg %p181
      %p188 = scmp.eq.s32.totalorder %s19, 1
      %p189 = por %p187, %p188
      %p190 = scmp.ne.s32.totalorder %s182, %s185
      %p191 = scmp.eq.s32.totalorder %s19, 0
      %p192 = por %p190, %p191
      %p193 = scmp.ne.s32.totalorder %s182, %s185
      %p194 = scmp.eq.s32.totalorder %s24, 1
      %p195 = por %p193, %p194
      %p196 = scmp.ne.s32.totalorder %s185, %s186
      %p197 = scmp.eq.s32.totalorder %s24, 0
      %p198 = por %p196, %p197
      %p199 = scmp.ne.s32.totalorder %s185, %s186
      %p200 = scmp.eq.s32.totalorder %s25, 1
      %p201 = por %p199, %p200
      %p203 = scmp.ne.s32.totalorder %s186, %s202
      %p204 = scmp.eq.s32.totalorder %s25, 0
      %p205 = por %p203, %p204
      %s206 = ssub.s32 %s26, %s38
      %s207 = ssub.s32 %s27, %s34
      %s208 = sor.u32 %s206, %s207
      %p209 = scmp.eq.s32.totalorder %s208, 0
      %s211 = sadd.s32 %s210, 1
      %s212 = scalar_select %p209, %s210, %s211
      %p215 = pneg %p209
      %p216 = scmp.eq.s32.totalorder %s19, 1
      %p217 = por %p215, %p216
      %p218 = scmp.ne.s32.totalorder %s210, %s213
      %p219 = scmp.eq.s32.totalorder %s19, 0
      %p220 = por %p218, %p219
      %p221 = scmp.ne.s32.totalorder %s210, %s213
      %p222 = scmp.eq.s32.totalorder %s24, 1
      %p223 = por %p221, %p222
      %p224 = scmp.ne.s32.totalorder %s213, %s214
      %p225 = scmp.eq.s32.totalorder %s24, 0
      %p226 = por %p224, %p225
      %p227 = scmp.ne.s32.totalorder %s213, %s214
      %p228 = scmp.eq.s32.totalorder %s25, 1
      %p229 = por %p227, %p228
      %p231 = scmp.ne.s32.totalorder %s214, %s230
      %p232 = scmp.eq.s32.totalorder %s25, 0
      %p233 = por %p231, %p232
      %s234 = ssub.s32 %s26, %s38
      %s235 = ssub.s32 %s27, %s34
      %s236 = sor.u32 %s234, %s235
      %p237 = scmp.eq.s32.totalorder %s236, 0
      %s239 = sadd.s32 %s238, 1
      %s240 = scalar_select %p237, %s238, %s239
      %p243 = pneg %p237
      %p244 = scmp.eq.s32.totalorder %s19, 1
      %p245 = por %p243, %p244
      %p246 = scmp.ne.s32.totalorder %s238, %s241
      %p247 = scmp.eq.s32.totalorder %s19, 0
      %p248 = por %p246, %p247
      %p249 = scmp.ne.s32.totalorder %s238, %s241
      %p250 = scmp.eq.s32.totalorder %s24, 1
      %p251 = por %p249, %p250
      %p252 = scmp.ne.s32.totalorder %s241, %s242
      %p253 = scmp.eq.s32.totalorder %s24, 0
      %p254 = por %p252, %p253
      %p255 = scmp.ne.s32.totalorder %s241, %s242
      %p256 = scmp.eq.s32.totalorder %s25, 1
      %p257 = por %p255, %p256
      %p259 = scmp.ne.s32.totalorder %s242, %s258
      %p260 = scmp.eq.s32.totalorder %s25, 0
      %p261 = por %p259, %p260
      %p262 = scmp.le.s32.totalorder 1, %s19
      %p263 = scmp.lt.s32.totalorder %s19, 3
      %p264 = pnand %p262, %p263
      %p265 = pneg %p264
      // Predicated region
      $region9: #{tpu_custom_call.1} parent=5 // pred_check
        _
      $region10: #{tpu_custom_call.1} parent=5 // pred_check_branch
        %267 = sbr.rel (%p264) target = $region12
      $region11: #{tpu_custom_call.1} parent=5 // pred_region
        %s268 = ssub.s32 %s19, 1
        // Predicated region
        $region13: #{tpu_custom_call.1} parent=11 // pred_check
          %p269 = pneg %p52
        $region14: #{tpu_custom_call.1} parent=11 // pred_check_branch
          %271 = sbr.rel (%p269) target = $region16
        $region15: #{tpu_custom_call.1} parent=11 // pred_region
          %s273 = ssub.s32 32, 32
          %274 = vsyncadd [#allocation3], %s273
          %s276 = sshll.u32 [#allocation2], 4
          %s277 = int_to_ptr.vmem [resolvable:$true] %s276
          %279 = dma.hbm_to_vmem [thread:$0]  %s0, 32, %s277, [#allocation3]
        $region16: #{tpu_custom_call.1} parent=11 // pred_fallthru
          _
        // Predicated region
        $region17: #{tpu_custom_call.1} parent=11 // pred_check
          %p280 = pneg %p73
        $region18: #{tpu_custom_call.1} parent=11 // pred_check_branch
          %282 = sbr.rel (%p280) target = $region20
        $region19: #{tpu_custom_call.1} parent=11 // pred_region
          %s284 = ssub.s32 128, 128
          %285 = vsyncadd [#allocation6], %s284
          %s287 = sshll.u32 [#allocation5], 4
          %s288 = int_to_ptr.vmem [resolvable:$true] %s287
          %290 = dma.hbm_to_vmem [thread:$0]  %s1, 128, %s288, [#allocation6]
        $region20: #{tpu_custom_call.1} parent=11 // pred_fallthru
          _
        // Predicated region
        $region21: #{tpu_custom_call.1} parent=11 // pred_check
          %p291 = pneg %p94
        $region22: #{tpu_custom_call.1} parent=11 // pred_check_branch
          %293 = sbr.rel (%p291) target = $region24
        $region23: #{tpu_custom_call.1} parent=11 // pred_region
          _
        $region24: #{tpu_custom_call.1} parent=11 // pred_fallthru
          _
        // Predicated region
        $region25: #{tpu_custom_call.1} parent=11 // pred_check
          %p294 = pneg %p120
        $region26: #{tpu_custom_call.1} parent=11 // pred_check_branch
          %296 = sbr.rel (%p294) target = $region28
        $region27: #{tpu_custom_call.1} parent=11 // pred_region
          %s297 = smul.u32 4, %s29
          %p298 = scmp.lt.s32.totalorder %s297, 3
          %s299 = scalar_select %p298, %s297, 3
          %s300 = smul.addr %s299, 8
          %s301 = scalar_lea.vmem %s3, %s300
          %s302 = smul.u32 4, %s29
        $region28: #{tpu_custom_call.1} parent=11 // pred_fallthru
          _
        // Predicated region
        $region29: #{tpu_custom_call.1} parent=11 // pred_check
          %p303 = pneg %p146
        $region30: #{tpu_custom_call.1} parent=11 // pred_check_branch
          %305 = sbr.rel (%p303) target = $region32
        $region31: #{tpu_custom_call.1} parent=11 // pred_region
          %s306 = smul.u32 4, %s29
          %p307 = scmp.lt.s32.totalorder %s306, 3
          %s308 = scalar_select %p307, %s306, 3
          %s309 = smul.addr %s308, 8
          %s310 = scalar_lea.vmem %s4, %s309
          %s311 = smul.u32 4, %s29
        $region32: #{tpu_custom_call.1} parent=11 // pred_fallthru
          _
        // Predicated region
        $region33: #{tpu_custom_call.1} parent=11 // pred_check
          %p312 = pneg %p172
        $region34: #{tpu_custom_call.1} parent=11 // pred_check_branch
          %314 = sbr.rel (%p312) target = $region36
        $region35: #{tpu_custom_call.1} parent=11 // pred_region
          %s315 = smul.u32 4, %s29
          %p316 = scmp.lt.s32.totalorder %s315, 3
          %s317 = scalar_select %p316, %s315, 3
          %s318 = smul.addr %s317, 8
          %s319 = scalar_lea.vmem %s5, %s318
          %s320 = smul.u32 4, %s29
        $region36: #{tpu_custom_call.1} parent=11 // pred_fallthru
          _
        // Predicated region
        $region37: #{tpu_custom_call.1} parent=11 // pred_check
          %p321 = pneg %p198
        $region38: #{tpu_custom_call.1} parent=11 // pred_check_branch
          %323 = sbr.rel (%p321) target = $region40
        $region39: #{tpu_custom_call.1} parent=11 // pred_region
          %s324 = smul.u32 4, %s29
          %p325 = scmp.lt.s32.totalorder %s324, 3
          %s326 = scalar_select %p325, %s324, 3
          %s327 = smul.addr %s326, 8
          %s328 = scalar_lea.vmem %s6, %s327
          %s329 = smul.u32 4, %s29
        $region40: #{tpu_custom_call.1} parent=11 // pred_fallthru
          _
      $region12: #{tpu_custom_call.1} parent=5 // pred_fallthru
        _
      %p330 = scmp.lt.s32.totalorder %s19, 2
      // Predicated region
      $region41: #{tpu_custom_call.1} parent=5 // pred_check
        %p331 = pneg %p330
      $region42: #{tpu_custom_call.1} parent=5 // pred_check_branch
        %333 = sbr.rel (%p331) target = $region44
      $region43: #{tpu_custom_call.1} parent=5 // pred_region
        // Predicated region
        $region45: #{tpu_custom_call.1} parent=43 // pred_check
          %p334 = pneg %p220
        $region46: #{tpu_custom_call.1} parent=43 // pred_check_branch
          %336 = sbr.rel (%p334) target = $region48
        $region47: #{tpu_custom_call.1} parent=43 // pred_region
          %s337 = sand.u32 %s19, 1
          %s338 = scalar_lea.sflag [#allocation3], %s337
          %s339 = sand.u32 %s210, 1
          %s340 = smul.addr %s339, 64
          %s341 = scalar_lea.vmem [#allocation7], %s340
          %s342 = smul.u32 4, %s27
          %s344 = ssub.s32 1024, 1024
          %345 = vsyncadd %s338, %s344
          %s346 = smul.addr %s342, 2
          %s347 = smul.addr %s26, 8
          %s348 = sadd.s32 %s346, %s347
          %s349 = smul.addr %s348, 128
          %s350 = scalar_lea.hbm %s7, %s349
          %s351 = sshll.u32 %s341, 4
          %s352 = int_to_ptr.vmem [resolvable:$true] %s351
          %357 = dma.hbm_to_vmem [thread:$0]  %s350, 1024, %s352, %s338, 256, 256, 16
        $region48: #{tpu_custom_call.1} parent=43 // pred_fallthru
          _
      $region44: #{tpu_custom_call.1} parent=5 // pred_fallthru
        _
      %p358 = scmp.le.s32.totalorder 1, %s19
      %p359 = scmp.lt.s32.totalorder %s19, 3
      %p360 = pnand %p358, %p359
      %p361 = pneg %p360
      // Predicated region
      $region49: #{tpu_custom_call.1} parent=5 // pred_check
        _
      $region50: #{tpu_custom_call.1} parent=5 // pred_check_branch
        %363 = sbr.rel (%p360) target = $region52
      $region51: #{tpu_custom_call.1} parent=5 // pred_region
        %s364 = ssub.s32 %s19, 1
        // Predicated region
        $region53: #{tpu_custom_call.1} parent=51 // pred_check
          %p365 = pneg %p52
        $region54: #{tpu_custom_call.1} parent=51 // pred_check_branch
          %367 = sbr.rel (%p365) target = $region56
        $region55: #{tpu_custom_call.1} parent=51 // pred_region
          %368 = dma.done [#allocation3], 32
        $region56: #{tpu_custom_call.1} parent=51 // pred_fallthru
          _
        // Predicated region
        $region57: #{tpu_custom_call.1} parent=51 // pred_check
          %p369 = pneg %p73
        $region58: #{tpu_custom_call.1} parent=51 // pred_check_branch
          %371 = sbr.rel (%p369) target = $region60
        $region59: #{tpu_custom_call.1} parent=51 // pred_region
          %372 = dma.done [#allocation6], 128
        $region60: #{tpu_custom_call.1} parent=51 // pred_fallthru
          _
        %s373 = sand.u32 %s24, 1
        %s374 = scalar_lea.sflag [#allocation3], %s373
        %s375 = sand.u32 %s213, 1
        %s376 = smul.addr %s375, 64
        %s377 = scalar_lea.vmem [#allocation7], %s376
        // Predicated region
        $region61: #{tpu_custom_call.1} parent=51 // pred_check
          %p378 = pneg %p226
        $region62: #{tpu_custom_call.1} parent=51 // pred_check_branch
          %380 = sbr.rel (%p378) target = $region64
        $region63: #{tpu_custom_call.1} parent=51 // pred_region
          %381 = dma.done %s374, 1024
        $region64: #{tpu_custom_call.1} parent=51 // pred_fallthru
          _
        %p382 = pneg %p52
        %p383 = pneg %p49
        %p384 = pneg %p73
        %p385 = pneg %p70
        %p386 = pneg %p94
        %p387 = pneg %p91
        %s388 = smul.u32 4, %s29
        %p389 = scmp.lt.s32.totalorder %s388, 3
        %s390 = scalar_select %p389, %s388, 3
        %s391 = smul.addr %s390, 8
        %s392 = scalar_lea.vmem %s3, %s391
        %p393 = pneg %p120
        %p394 = pneg %p117
        %s395 = smul.u32 4, %s29
        %p396 = scmp.lt.s32.totalorder %s395, 3
        %s397 = scalar_select %p396, %s395, 3
        %s398 = smul.addr %s397, 8
        %s399 = scalar_lea.vmem %s4, %s398
        %p400 = pneg %p146
        %p401 = pneg %p143
        %s402 = smul.u32 4, %s29
        %p403 = scmp.lt.s32.totalorder %s402, 3
        %s404 = scalar_select %p403, %s402, 3
        %s405 = smul.addr %s404, 8
        %s406 = scalar_lea.vmem %s5, %s405
        %p407 = pneg %p172
        %p408 = pneg %p169
        %s409 = smul.u32 4, %s29
        %p410 = scmp.lt.s32.totalorder %s409, 3
        %s411 = scalar_select %p410, %s409, 3
        %s412 = smul.addr %s411, 8
        %s413 = scalar_lea.vmem %s6, %s412
        %p414 = pneg %p198
        %p415 = pneg %p195
        %s416 = sand.u32 %s24, 1
        %s417 = scalar_lea.sflag [#allocation3], %s416
        %s418 = sand.u32 %s213, 1
        %s419 = smul.addr %s418, 64
        %s420 = scalar_lea.vmem [#allocation7], %s419
        %p421 = pneg %p226
        %p422 = pneg %p223
        %p423 = pneg %p254
        %p424 = pneg %p251
        %s425 = sand.u32 %s241, 1
        %s426 = scalar_lea.sflag [#allocation4], %s425
        %s427 = sand.u32 %s241, 1
        %s428 = smul.addr %s427, 64
        %s429 = scalar_lea.vmem [#allocation8], %s428
        %s430 = smul.u32 4, %s29
        %p431 = scmp.lt.s32.totalorder %s430, 3
        %s432 = scalar_select %p431, %s430, 3
        %s433 = smul.addr %s432, 8
        %s434 = scalar_lea.vmem %s3, %s433
        %s435 = smul.u32 4, %s29
        %s436 = smul.u32 4, %s29
        %p437 = scmp.lt.s32.totalorder %s436, 3
        %s438 = scalar_select %p437, %s436, 3
        %s439 = smul.addr %s438, 8
        %s440 = scalar_lea.vmem %s4, %s439
        %s441 = smul.u32 4, %s29
        %s442 = smul.u32 4, %s29
        %p443 = scmp.lt.s32.totalorder %s442, 3
        %s444 = scalar_select %p443, %s442, 3
        %s445 = smul.addr %s444, 8
        %s446 = scalar_lea.vmem %s5, %s445
        %s447 = smul.u32 4, %s29
        %s448 = smul.u32 4, %s29
        %p449 = scmp.lt.s32.totalorder %s448, 3
        %s450 = scalar_select %p449, %s448, 3
        %s451 = smul.addr %s450, 8
        %s452 = scalar_lea.vmem %s6, %s451
        %s453 = smul.u32 4, %s29
        %s454 = smul.u32 4, %s29
        %s455 = smul.u32 4, %s29
        %s456 = scalar_lea.vmem [#allocation2], %s28
        %v457 = vld [vmem:[%s456] sm:$0x1]
        %v458 = vlaneseq
        %v459 = vshrl.u32 %v458, 7
        %v460 = vsub.s32 0, %v459
        %v461 = vrot.slane %v457, %v460
        %463 = vbcast.lane.b32.xlu0 %v461, 256
        %v464 = vpop.permute.xlu0 %463
        %v465 = vld [vmem:[#allocation5] sm:$0xff]
        %v466 = vmul.f32 %v464, %v465
        %v467 = vrot.slane %v466, 4
        %v468 = vadd.f32 %v466, %v467
        %v469 = vrot.slane %v468, 2
        %v470 = vadd.f32 %v468, %v469
        %v471 = vrot.slane %v470, 1
        %v472 = vadd.f32 %v470, %v471
        %v473 = vld [vmem:[%s2] sm:$0x1]
        %v474 = vadd.f32 %v472, %v473
        %v475 = vmax.f32 %v474, 0.0
        %v476 = vld [vmem:[%s434] sm:$0xff]
        %v477 = vld [vmem:[%s434 + $0x8] sm:$0xff]
        %v478 = vld [vmem:[%s434 + $0x10] sm:$0xff]
        %v479 = vld [vmem:[%s434 + $0x18] sm:$0xff]
        %v480 = vlaneseq
        %v481 = vshrl.u32 %v480, 7
        %v482 = vsub.s32 0, %v481
        %v483 = vrot.slane %v475, %v482
        %v484 = vmul.f32 %v483, %v476
        %v485 = vmul.f32 %v483, %v477
        %v486 = vmul.f32 %v483, %v478
        %v487 = vmul.f32 %v483, %v479
        %488 = vadd.xlane.f32.xlu0 %v484
        %v489 = vpop.xlane.xlu0 %488
        %490 = vadd.xlane.f32.xlu0 %v485
        %v491 = vpop.xlane.xlu0 %490
        %492 = vadd.xlane.f32.xlu0 %v486
        %v493 = vpop.xlane.xlu0 %492
        %494 = vadd.xlane.f32.xlu0 %v487
        %v495 = vpop.xlane.xlu0 %494
        %v496 = vld [vmem:[%s440] sm:$0xff]
        %v497 = vld [vmem:[%s440 + $0x8] sm:$0xff]
        %v498 = vld [vmem:[%s440 + $0x10] sm:$0xff]
        %v499 = vld [vmem:[%s440 + $0x18] sm:$0xff]
        %v500 = vadd.f32 %v489, %v496
        %v501 = vadd.f32 %v491, %v497
        %v502 = vadd.f32 %v493, %v498
        %v503 = vadd.f32 %v495, %v499
        %v504 = vld [vmem:[%s446] sm:$0xff]
        %v505 = vld [vmem:[%s446 + $0x8] sm:$0xff]
        %v506 = vld [vmem:[%s446 + $0x10] sm:$0xff]
        %v507 = vld [vmem:[%s446 + $0x18] sm:$0xff]
        %v508 = vmul.f32 %v483, %v504
        %v509 = vmul.f32 %v483, %v505
        %v510 = vmul.f32 %v483, %v506
        %v511 = vmul.f32 %v483, %v507
        %512 = vadd.xlane.f32.xlu0 %v508
        %v513 = vpop.xlane.xlu0 %512
        %514 = vadd.xlane.f32.xlu0 %v509
        %v515 = vpop.xlane.xlu0 %514
        %516 = vadd.xlane.f32.xlu0 %v510
        %v517 = vpop.xlane.xlu0 %516
        %518 = vadd.xlane.f32.xlu0 %v511
        %v519 = vpop.xlane.xlu0 %518
        %v520 = vld [vmem:[%s452] sm:$0xff]
        %v521 = vld [vmem:[%s452 + $0x8] sm:$0xff]
        %v522 = vld [vmem:[%s452 + $0x10] sm:$0xff]
        %v523 = vld [vmem:[%s452 + $0x18] sm:$0xff]
        %v524 = vadd.f32 %v513, %v520
        %v525 = vadd.f32 %v515, %v521
        %v526 = vadd.f32 %v517, %v522
        %v527 = vadd.f32 %v519, %v523
        %v528 = vld [vmem:[%s377] sm:$0xff]
        %v529 = vld [vmem:[%s377 + $0x8] sm:$0xff]
        %v530 = vld [vmem:[%s377 + $0x10] sm:$0xff]
        %v531 = vld [vmem:[%s377 + $0x18] sm:$0xff]
        %v532 = vld [vmem:[%s377 + $0x20] sm:$0xff]
        %v533 = vld [vmem:[%s377 + $0x28] sm:$0xff]
        %v534 = vld [vmem:[%s377 + $0x30] sm:$0xff]
        %v535 = vld [vmem:[%s377 + $0x38] sm:$0xff]
        %v536 = vadd.f32 %v528, %v529
        %537 = vadd.xlane.f32.xlu0 %v536
        %v538 = vpop.xlane.xlu0 %537
        %v539 = vadd.f32 %v530, %v531
        %540 = vadd.xlane.f32.xlu0 %v539
        %v541 = vpop.xlane.xlu0 %540
        %v542 = vadd.f32 %v532, %v533
        %543 = vadd.xlane.f32.xlu0 %v542
        %v544 = vpop.xlane.xlu0 %543
        %v545 = vadd.f32 %v534, %v535
        %546 = vadd.xlane.f32.xlu0 %v545
        %v547 = vpop.xlane.xlu0 %546
        %v548 = vmul.f32 %v528, %v528
        %v549 = vmul.f32 %v529, %v529
        %v550 = vmul.f32 %v530, %v530
        %v551 = vmul.f32 %v531, %v531
        %v552 = vmul.f32 %v532, %v532
        %v553 = vmul.f32 %v533, %v533
        %v554 = vmul.f32 %v534, %v534
        %v555 = vmul.f32 %v535, %v535
        %v556 = vadd.f32 %v548, %v549
        %557 = vadd.xlane.f32.xlu0 %v556
        %v558 = vpop.xlane.xlu0 %557
        %v559 = vadd.f32 %v550, %v551
        %560 = vadd.xlane.f32.xlu0 %v559
        %v561 = vpop.xlane.xlu0 %560
        %v562 = vadd.f32 %v552, %v553
        %563 = vadd.xlane.f32.xlu0 %v562
        %v564 = vpop.xlane.xlu0 %563
        %v565 = vadd.f32 %v554, %v555
        %566 = vadd.xlane.f32.xlu0 %v565
        %v567 = vpop.xlane.xlu0 %566
        %v568 = vmul.f32 %v538, 0.00390625
        %v569 = vmul.f32 %v541, 0.00390625
        %v570 = vmul.f32 %v544, 0.00390625
        %v571 = vmul.f32 %v547, 0.00390625
        %v572 = vmul.f32 %v558, 0.00390625
        %v573 = vmul.f32 %v561, 0.00390625
        %v574 = vmul.f32 %v564, 0.00390625
        %v575 = vmul.f32 %v567, 0.00390625
        %v576 = vmul.f32 %v568, %v568
        %v577 = vmul.f32 %v569, %v569
        %v578 = vmul.f32 %v570, %v570
        %v579 = vmul.f32 %v571, %v571
        %v580 = vsub.f32 %v572, %v576
        %v581 = vsub.f32 %v573, %v577
        %v582 = vsub.f32 %v574, %v578
        %v583 = vsub.f32 %v575, %v579
        %v584 = vmax.f32 %v580, 0.0
        %v585 = vmax.f32 %v581, 0.0
        %v586 = vmax.f32 %v582, 0.0
        %v587 = vmax.f32 %v583, 0.0
        %v588 = vadd.f32 %v584, 1e-05
        %v589 = vadd.f32 %v585, 1e-05
        %v590 = vadd.f32 %v586, 1e-05
        %v591 = vadd.f32 %v587, 1e-05
        %v592 = vrsqrt.pop %v588
        %v593 = vrsqrt.pop %v589
        %v594 = vrsqrt.pop %v590
        %v595 = vrsqrt.pop %v591
        %v596 = vadd.f32 %v500, 1.0
        %v597 = vadd.f32 %v501, 1.0
        %v598 = vadd.f32 %v502, 1.0
        %v599 = vadd.f32 %v503, 1.0
        %v600 = vmul.f32 %v592, %v596
        %v601 = vmul.f32 %v593, %v597
        %v602 = vmul.f32 %v594, %v598
        %v603 = vmul.f32 %v595, %v599
        %v604 = vmul.f32 %v568, %v600
        %v605 = vmul.f32 %v569, %v601
        %v606 = vmul.f32 %v570, %v602
        %v607 = vmul.f32 %v571, %v603
        %v608 = vsub.f32 %v524, %v604
        %v609 = vsub.f32 %v525, %v605
        %v610 = vsub.f32 %v526, %v606
        %v611 = vsub.f32 %v527, %v607
        %613 = vset.pattern.permute.xlu0 0
        %614 = vperm.xlu0 %613, %v600
        %v615 = vpop.permute.xlu0 %614
        %618 = vset.pattern.permute.xlu0 0
        %619 = vperm.xlu0 %618, %v601
        %v620 = vpop.permute.xlu0 %619
        %623 = vset.pattern.permute.xlu0 0
        %624 = vperm.xlu0 %623, %v602
        %v625 = vpop.permute.xlu0 %624
        %628 = vset.pattern.permute.xlu0 0
        %629 = vperm.xlu0 %628, %v603
        %v630 = vpop.permute.xlu0 %629
        %v632 = vmul.f32 %v528, %v615
        %v633 = vmul.f32 %v529, %v615
        %v634 = vmul.f32 %v530, %v620
        %v635 = vmul.f32 %v531, %v620
        %v636 = vmul.f32 %v532, %v625
        %v637 = vmul.f32 %v533, %v625
        %v638 = vmul.f32 %v534, %v630
        %v639 = vmul.f32 %v535, %v630
        %641 = vset.pattern.permute.xlu0 0
        %642 = vperm.xlu0 %641, %v608
        %v643 = vpop.permute.xlu0 %642
        %646 = vset.pattern.permute.xlu0 0
        %647 = vperm.xlu0 %646, %v609
        %v648 = vpop.permute.xlu0 %647
        %651 = vset.pattern.permute.xlu0 0
        %652 = vperm.xlu0 %651, %v610
        %v653 = vpop.permute.xlu0 %652
        %656 = vset.pattern.permute.xlu0 0
        %657 = vperm.xlu0 %656, %v611
        %v658 = vpop.permute.xlu0 %657
        %v660 = vadd.f32 %v632, %v643
        %v661 = vadd.f32 %v633, %v643
        %v662 = vadd.f32 %v634, %v648
        %v663 = vadd.f32 %v635, %v648
        %v664 = vadd.f32 %v636, %v653
        %v665 = vadd.f32 %v637, %v653
        %v666 = vadd.f32 %v638, %v658
        %v667 = vadd.f32 %v639, %v658
        %668 = vst [vmem:[%s429] sm:$0xff] %v660
        %669 = vst [vmem:[%s429 + $0x8] sm:$0xff] %v661
        %670 = vst [vmem:[%s429 + $0x10] sm:$0xff] %v662
        %671 = vst [vmem:[%s429 + $0x18] sm:$0xff] %v663
        %672 = vst [vmem:[%s429 + $0x20] sm:$0xff] %v664
        %673 = vst [vmem:[%s429 + $0x28] sm:$0xff] %v665
        %674 = vst [vmem:[%s429 + $0x30] sm:$0xff] %v666
        %675 = vst [vmem:[%s429 + $0x38] sm:$0xff] %v667
        %s676 = sand.u32 %s241, 1
        %s677 = scalar_lea.sflag [#allocation4], %s676
        %s678 = sand.u32 %s241, 1
        %s679 = smul.addr %s678, 64
        %s680 = scalar_lea.vmem [#allocation8], %s679
        // Predicated region
        $region65: #{tpu_custom_call.1} parent=51 // pred_check
          %p681 = pneg %p251
        $region66: #{tpu_custom_call.1} parent=51 // pred_check_branch
          %683 = sbr.rel (%p681) target = $region68
        $region67: #{tpu_custom_call.1} parent=51 // pred_region
          %s684 = smul.u32 4, %s29
          %s686 = ssub.s32 1024, 1024
          %687 = vsyncadd %s677, %s686
          %s688 = smul.addr %s684, 2
          %s689 = smul.addr %s28, 8
          %s690 = sadd.s32 %s688, %s689
          %s691 = smul.addr %s690, 128
          %s692 = scalar_lea.hbm %s8, %s691
          %s693 = sshll.u32 %s680, 4
          %s694 = int_to_ptr.vmem [resolvable:$true] %s693
          %699 = dma.vmem_to_hbm [thread:$0]  %s694, 1024, %s692, %s677, 256, 256, 16
        $region68: #{tpu_custom_call.1} parent=51 // pred_fallthru
          _
      $region52: #{tpu_custom_call.1} parent=5 // pred_fallthru
        _
      %p700 = scmp.le.s32.totalorder 2, %s19
      // Predicated region
      $region69: #{tpu_custom_call.1} parent=5 // pred_check
        %p701 = pneg %p700
      $region70: #{tpu_custom_call.1} parent=5 // pred_check_branch
        %703 = sbr.rel (%p701) target = $region72
      $region71: #{tpu_custom_call.1} parent=5 // pred_region
        %s704 = ssub.s32 %s19, 2
        // Predicated region
        $region73: #{tpu_custom_call.1} parent=71 // pred_check
          %p705 = pneg %p257
        $region74: #{tpu_custom_call.1} parent=71 // pred_check_branch
          %707 = sbr.rel (%p705) target = $region76
        $region75: #{tpu_custom_call.1} parent=71 // pred_region
          %s708 = sand.u32 %s242, 1
          %s709 = scalar_lea.sflag [#allocation4], %s708
          %s710 = sand.u32 %s242, 1
          %s711 = smul.addr %s710, 64
          %s712 = scalar_lea.vmem [#allocation8], %s711
          %713 = dma.done %s709, 1024
        $region76: #{tpu_custom_call.1} parent=71 // pred_fallthru
          _
      $region72: #{tpu_custom_call.1} parent=5 // pred_fallthru
        _
    $region6: #{tpu_custom_call.1} parent=1 // loop_footer
      %s23 = sadd.s32 1, %s19
    $region7: #{tpu_custom_call.1} parent=1 // loop_footer_branch
      %18 = sbr.rel target = $region3
    $region8: #{tpu_custom_call.1} parent=1 // loop_exit
      _
    %714 = vsyncpa [#allocation3], 1
    %s715 = scalar_lea.sflag [#allocation3], 1
    %716 = vsyncpa %s715, 1
    %717 = vsyncpa [#allocation6], 1
    %718 = vsyncpa [#allocation4], 1
    %s719 = scalar_lea.sflag [#allocation4], 1
    %720 = vsyncpa %s719, 1

</llo_original>
